<compile_context>
chip_gen: v5e
topology: v5e:2x2
jax: 0.10.0
libtpu: 0.0.40
codegen_flags: <defaults>
</compile_context>

<pallas_src>
import jax
import jax.numpy as jnp
from jax.experimental import pallas as pl
from jax.experimental.pallas import tpu as pltpu


# True hidden sizes are 10, 100, 10; padded to sublane/lane friendly sizes.
D1, D2, D3 = 10, 100, 10
D1P, D2P, D3P = 16, 128, 16


def _round_up(n, m):
    return ((n + m - 1) // m) * m


def mlp_kernel(x_ref,            # (1, TB)     activations, batch on lanes
               w1_ref, b1_ref,   # (D1P, 1), (D1P, 1)
               w2_ref, b2_ref,   # (D2P, D1P), (D2P, 1)   w2 may be bf16
               w3_ref, b3_ref,   # (D3P, D2P), (D3P, 1)   w3 may be bf16
               w4_ref, b4_ref,   # (D3P, 1), (1, 1)
               o_ref):           # (1, TB)
    x = x_ref[...]                                                   # (1, TB) f32

    # Layer 1: Linear(1, 10) + ReLU.  K == 1 -> VPU broadcast multiply, no MXU.
    h1 = jnp.maximum(w1_ref[...] * x + b1_ref[...], 0.0)            # (D1P, TB) f32

    # Layer 2: Linear(10, 100) + ReLU.  Lane-dense MXU matmul, f32 accumulation.
    h2 = jnp.dot(w2_ref[...], h1.astype(w2_ref.dtype),
                 preferred_element_type=jnp.float32) + b2_ref[...]
    h2 = jnp.maximum(h2, 0.0)                                        # (D2P, TB) f32

    # Layer 3: Linear(100, 10) + ReLU.
    h3 = jnp.dot(w3_ref[...], h2.astype(w3_ref.dtype),
                 preferred_element_type=jnp.float32) + b3_ref[...]
    h3 = jnp.maximum(h3, 0.0)                                        # (D3P, TB) f32

    # Layer 4: Linear(10, 1).  N == 1 -> VPU multiply + sublane reduction, no MXU.
    out = jnp.sum(w4_ref[...] * h3, axis=0, keepdims=True) + b4_ref[...]  # (1, TB)

    o_ref[...] = out.astype(o_ref.dtype)


def init_params(key):
    """PyTorch nn.Linear layout: W is (out_features, in_features), b is (out_features,).
    Uniform(-1/sqrt(fan_in), 1/sqrt(fan_in)) like the torch default."""
    dims = [(1, D1), (D1, D2), (D2, D3), (D3, 1)]  # (in, out)
    params = []
    for fan_in, fan_out in dims:
        key, kw, kb = jax.random.split(key, 3)
        bound = 1.0 / jnp.sqrt(jnp.float32(fan_in))
        w = jax.random.uniform(kw, (fan_out, fan_in), jnp.float32, -bound, bound)
        b = jax.random.uniform(kb, (fan_out,), jnp.float32, -bound, bound)
        params.append((w, b))
    return params


def prepare_params(params, mxu_dtype=jnp.bfloat16):
    """Zero-pad + lay out the PyTorch-shaped params for the transposed kernel.

    w2/w3 (the only MXU operands) are stored in `mxu_dtype` (bf16 by default for
    ~3x MXU throughput on v6e/v7x); all biases and the VPU-only w1/w4 stay f32.
    """
    (W1, b1), (W2, b2), (W3, b3), (W4, b4) = params
    w1p = jnp.zeros((D1P, 1), jnp.float32).at[:D1, :].set(W1)          # (16, 1)
    b1p = jnp.zeros((D1P, 1), jnp.float32).at[:D1, 0].set(b1)
    w2p = jnp.zeros((D2P, D1P), jnp.float32).at[:D2, :D1].set(W2)      # (128, 16)
    b2p = jnp.zeros((D2P, 1), jnp.float32).at[:D2, 0].set(b2)
    w3p = jnp.zeros((D3P, D2P), jnp.float32).at[:D3, :D2].set(W3)      # (16, 128)
    b3p = jnp.zeros((D3P, 1), jnp.float32).at[:D3, 0].set(b3)
    w4p = jnp.zeros((D3P, 1), jnp.float32).at[:D3, :].set(W4.T)        # (16, 1)
    b4p = b4.reshape(1, 1)
    w2p = w2p.astype(mxu_dtype)
    w3p = w3p.astype(mxu_dtype)
    return [(w1p, b1p), (w2p, b2p), (w3p, b3p), (w4p, b4p)]


def mlp_forward(x, padded_params, tb_max=8192):
    """x: (batch, 1) float32 -> (batch, 1) float32."""
    batch = x.shape[0]

    # Lane-aligned batch tile, as big as possible (amortize per-grid-step overhead),
    # but halved when everything would fit in one tile so the grid has >= 2 steps
    # and v7x's two TensorCores both get work.
    tb = min(_round_up(tb_max, 128), _round_up(batch, 128))
    bp = _round_up(batch, tb)
    if bp // tb == 1 and tb >= 256:
        tb = _round_up(tb // 2, 128)
        bp = _round_up(batch, tb)
    grid = bp // tb

    # Copy-free repack: (batch, 1) -> (1, batch) is a free row-major reshape; pad the
    # lane axis only if the batch is not already tile-aligned.
    x_flat = x.reshape(1, batch)
    x_t = jnp.pad(x_flat, ((0, 0), (0, bp - batch))) if bp != batch else x_flat

    (w1, b1), (w2, b2), (w3, b3), (w4, b4) = padded_params

    def resident(arr):
        # Full-array block, same block index every grid step -> stays in VMEM.
        return pl.BlockSpec(arr.shape, lambda i: (0, 0))

    weight_bytes = sum(int(a.size) * a.dtype.itemsize
                       for pair in padded_params for a in pair)
    cost = pl.CostEstimate(
        flops=2 * (D2P * D1P + D3P * D2P + D1P + D3P) * bp,
        transcendentals=0,
        bytes_accessed=8 * bp + weight_bytes,   # x in + out, both f32, plus weights
    )

    out_t = pl.pallas_call(
        mlp_kernel,
        out_shape=jax.ShapeDtypeStruct((1, bp), jnp.float32),
        grid=(grid,),
        in_specs=[
            pl.BlockSpec((1, tb), lambda i: (0, i)),   # x tile, pipelined
            resident(w1), resident(b1),
            resident(w2), resident(b2),
            resident(w3), resident(b3),
            resident(w4), resident(b4),
        ],
        out_specs=pl.BlockSpec((1, tb), lambda i: (0, i)),
        compiler_params=pltpu.CompilerParams(
            dimension_semantics=("parallel",)),
        cost_estimate=cost,
    )(x_t, w1, b1, w2, b2, w3, b3, w4, b4)

    return out_t[0, :batch].reshape(batch, 1)


def reference_forward(x, params):
    """Pure-JAX reference in PyTorch semantics: h = x @ W.T + b, ReLU between layers."""
    h = x
    for i, (w, b) in enumerate(params):
        h = h @ w.T + b
        if i < len(params) - 1:
            h = jnp.maximum(h, 0.0)
    return h


if __name__ == "__main__":
    key = jax.random.PRNGKey(0)
    key, kx = jax.random.split(key)

    batch = 8
    x = jax.random.normal(kx, (batch, 1), jnp.float32)
    params = init_params(key)
    ref = reference_forward(x, params)

    # 1) Exact f32 path: verifies layout / padding / degenerate-layer handling.
    p_f32 = prepare_params(params, mxu_dtype=jnp.float32)
    out_f32 = jax.block_until_ready(mlp_forward(x, p_f32))
    assert out_f32.shape == (batch, 1), out_f32.shape
    assert jnp.allclose(out_f32, ref, atol=1e-5, rtol=1e-5), (out_f32, ref)

    # 2) bf16-MXU path (production default on v6e/v7x): sanity check at bf16 precision.
    p_bf16 = prepare_params(params, mxu_dtype=jnp.bfloat16)
    out_bf16 = jax.block_until_ready(mlp_forward(x, p_bf16))
    assert out_bf16.shape == (batch, 1), out_bf16.shape
    assert jnp.allclose(out_bf16, ref, atol=1e-1, rtol=1e-1), (out_bf16, ref)

    print("KERNEL_OK")
</pallas_src>

<mosaic_0001>
module attributes {stable_mosaic.version = 11 : i64} {
  func.func @mlp_kernel(%arg0: i32, %arg1: memref<1x128xf32, #tpu.memory_space<vmem>>, %arg2: memref<16x1xf32, #tpu.memory_space<vmem>>, %arg3: memref<16x1xf32, #tpu.memory_space<vmem>>, %arg4: memref<128x16xf32, #tpu.memory_space<vmem>>, %arg5: memref<128x1xf32, #tpu.memory_space<vmem>>, %arg6: memref<16x128xf32, #tpu.memory_space<vmem>>, %arg7: memref<16x1xf32, #tpu.memory_space<vmem>>, %arg8: memref<16x1xf32, #tpu.memory_space<vmem>>, %arg9: memref<1x1xf32, #tpu.memory_space<vmem>>, %arg10: memref<1x128xf32, #tpu.memory_space<vmem>>) attributes {dimension_semantics = [#tpu.dimension_semantics<parallel>], iteration_bounds = array<i64: 1>, scalar_prefetch = 0 : i64, scratch_operands = 0 : i64, tpu.core_type = #tpu.core_type<tc>, window_params = [{transform_indices = @transform_0, window_bounds = array<i64: 1, 128>}, {pipeline_mode = #tpu.pipeline_mode<synchronous>, transform_indices = @transform_1, window_bounds = array<i64: 16, 1>}, {pipeline_mode = #tpu.pipeline_mode<synchronous>, transform_indices = @transform_2, window_bounds = array<i64: 16, 1>}, {pipeline_mode = #tpu.pipeline_mode<synchronous>, transform_indices = @transform_3, window_bounds = array<i64: 128, 16>}, {pipeline_mode = #tpu.pipeline_mode<synchronous>, transform_indices = @transform_4, window_bounds = array<i64: 128, 1>}, {pipeline_mode = #tpu.pipeline_mode<synchronous>, transform_indices = @transform_5, window_bounds = array<i64: 16, 128>}, {pipeline_mode = #tpu.pipeline_mode<synchronous>, transform_indices = @transform_6, window_bounds = array<i64: 16, 1>}, {pipeline_mode = #tpu.pipeline_mode<synchronous>, transform_indices = @transform_7, window_bounds = array<i64: 16, 1>}, {pipeline_mode = #tpu.pipeline_mode<synchronous>, transform_indices = @transform_8, window_bounds = array<i64: 1, 1>}, {transform_indices = @transform_9, window_bounds = array<i64: 1, 128>}]} {
    %c0 = arith.constant 0 : index
    %c0_0 = arith.constant 0 : index
    %0 = vector.load %arg1[%c0, %c0_0] : memref<1x128xf32, #tpu.memory_space<vmem>>, vector<1x128xf32>
    %c0_1 = arith.constant 0 : index
    %c0_2 = arith.constant 0 : index
    %1 = vector.load %arg2[%c0_1, %c0_2] : memref<16x1xf32, #tpu.memory_space<vmem>>, vector<16x1xf32>
    %2 = vector.broadcast %1 : vector<16x1xf32> to vector<16x128xf32>
    %3 = vector.broadcast %0 : vector<1x128xf32> to vector<16x128xf32>
    %4 = arith.mulf %2, %3 : vector<16x128xf32>
    %c0_3 = arith.constant 0 : index
    %c0_4 = arith.constant 0 : index
    %5 = vector.load %arg3[%c0_3, %c0_4] : memref<16x1xf32, #tpu.memory_space<vmem>>, vector<16x1xf32>
    %6 = vector.broadcast %5 : vector<16x1xf32> to vector<16x128xf32>
    %7 = arith.addf %4, %6 : vector<16x128xf32>
    %cst = arith.constant 0.000000e+00 : f32
    %8 = vector.broadcast %cst : f32 to vector<16x128xf32>
    %9 = arith.maximumf %7, %8 : vector<16x128xf32>
    %c0_5 = arith.constant 0 : index
    %c0_6 = arith.constant 0 : index
    %10 = vector.load %arg4[%c0_5, %c0_6] : memref<128x16xf32, #tpu.memory_space<vmem>>, vector<128x16xf32>
    %cst_7 = arith.constant dense<0.000000e+00> : vector<128x128xf32>
    %11 = tpu.matmul %10, %9, %cst_7 {dimension_numbers = #tpu.dot_dimension_numbers<[1], [0], [0], [1], [0, 0, 1, 1], [], []>} : vector<128x16xf32>, vector<16x128xf32>, vector<128x128xf32> -> vector<128x128xf32>
    %c0_8 = arith.constant 0 : index
    %c0_9 = arith.constant 0 : index
    %12 = vector.load %arg5[%c0_8, %c0_9] : memref<128x1xf32, #tpu.memory_space<vmem>>, vector<128x1xf32>
    %13 = vector.broadcast %12 : vector<128x1xf32> to vector<128x128xf32>
    %14 = arith.addf %11, %13 : vector<128x128xf32>
    %cst_10 = arith.constant 0.000000e+00 : f32
    %15 = vector.broadcast %cst_10 : f32 to vector<128x128xf32>
    %16 = arith.maximumf %14, %15 : vector<128x128xf32>
    %c0_11 = arith.constant 0 : index
    %c0_12 = arith.constant 0 : index
    %17 = vector.load %arg6[%c0_11, %c0_12] : memref<16x128xf32, #tpu.memory_space<vmem>>, vector<16x128xf32>
    %cst_13 = arith.constant dense<0.000000e+00> : vector<16x128xf32>
    %18 = tpu.matmul %17, %16, %cst_13 {dimension_numbers = #tpu.dot_dimension_numbers<[1], [0], [0], [1], [0, 0, 1, 1], [], []>} : vector<16x128xf32>, vector<128x128xf32>, vector<16x128xf32> -> vector<16x128xf32>
    %c0_14 = arith.constant 0 : index
    %c0_15 = arith.constant 0 : index
    %19 = vector.load %arg7[%c0_14, %c0_15] : memref<16x1xf32, #tpu.memory_space<vmem>>, vector<16x1xf32>
    %20 = vector.broadcast %19 : vector<16x1xf32> to vector<16x128xf32>
    %21 = arith.addf %18, %20 : vector<16x128xf32>
    %cst_16 = arith.constant 0.000000e+00 : f32
    %22 = vector.broadcast %cst_16 : f32 to vector<16x128xf32>
    %23 = arith.maximumf %21, %22 : vector<16x128xf32>
    %c0_17 = arith.constant 0 : index
    %c0_18 = arith.constant 0 : index
    %24 = vector.load %arg8[%c0_17, %c0_18] : memref<16x1xf32, #tpu.memory_space<vmem>>, vector<16x1xf32>
    %25 = vector.broadcast %24 : vector<16x1xf32> to vector<16x128xf32>
    %26 = arith.mulf %25, %23 : vector<16x128xf32>
    %cst_19 = arith.constant dense<0.000000e+00> : vector<128xf32>
    %27 = vector.multi_reduction <add>, %26, %cst_19 [0] : vector<16x128xf32> to vector<128xf32>
    %28 = vector.shape_cast %27 : vector<128xf32> to vector<1x128xf32>
    %c0_20 = arith.constant 0 : index
    %c0_21 = arith.constant 0 : index
    %29 = vector.load %arg9[%c0_20, %c0_21] : memref<1x1xf32, #tpu.memory_space<vmem>>, vector<1x1xf32>
    %30 = vector.broadcast %29 : vector<1x1xf32> to vector<1x128xf32>
    %31 = arith.addf %28, %30 : vector<1x128xf32>
    %c0_22 = arith.constant 0 : index
    %c0_23 = arith.constant 0 : index
    %32 = vector.load %arg10[%c0_22, %c0_23] : memref<1x128xf32, #tpu.memory_space<vmem>>, vector<1x128xf32>
    tpu.vector_store %arg10[%c0_22, %c0_23], %31 {strides = array<i32>} : memref<1x128xf32, #tpu.memory_space<vmem>>, vector<1x128xf32>,
    return
  }
  func.func @transform_0(%arg0: i32) -> (i32, i32) {
    %c0_i32 = arith.constant 0 : i32
    %c0_i32_0 = arith.constant 0 : i32
    return %c0_i32, %arg0 : i32, i32
  }
  func.func @transform_1(%arg0: i32) -> (i32, i32) {
    %c0_i32 = arith.constant 0 : i32
    %c0_i32_0 = arith.constant 0 : i32
    %c0_i32_1 = arith.constant 0 : i32
    return %c0_i32, %c0_i32_0 : i32, i32
  }
  func.func @transform_2(%arg0: i32) -> (i32, i32) {
    %c0_i32 = arith.constant 0 : i32
    %c0_i32_0 = arith.constant 0 : i32
    %c0_i32_1 = arith.constant 0 : i32
    return %c0_i32, %c0_i32_0 : i32, i32
  }
  func.func @transform_3(%arg0: i32) -> (i32, i32) {
    %c0_i32 = arith.constant 0 : i32
    %c0_i32_0 = arith.constant 0 : i32
    %c0_i32_1 = arith.constant 0 : i32
    return %c0_i32, %c0_i32_0 : i32, i32
  }
  func.func @transform_4(%arg0: i32) -> (i32, i32) {
    %c0_i32 = arith.constant 0 : i32
    %c0_i32_0 = arith.constant 0 : i32
    %c0_i32_1 = arith.constant 0 : i32
    return %c0_i32, %c0_i32_0 : i32, i32
  }
  func.func @transform_5(%arg0: i32) -> (i32, i32) {
    %c0_i32 = arith.constant 0 : i32
    %c0_i32_0 = arith.constant 0 : i32
    %c0_i32_1 = arith.constant 0 : i32
    return %c0_i32, %c0_i32_0 : i32, i32
  }
  func.func @transform_6(%arg0: i32) -> (i32, i32) {
    %c0_i32 = arith.constant 0 : i32
    %c0_i32_0 = arith.constant 0 : i32
    %c0_i32_1 = arith.constant 0 : i32
    return %c0_i32, %c0_i32_0 : i32, i32
  }
  func.func @transform_7(%arg0: i32) -> (i32, i32) {
    %c0_i32 = arith.constant 0 : i32
    %c0_i32_0 = arith.constant 0 : i32
    %c0_i32_1 = arith.constant 0 : i32
    return %c0_i32, %c0_i32_0 : i32, i32
  }
  func.func @transform_8(%arg0: i32) -> (i32, i32) {
    %c0_i32 = arith.constant 0 : i32
    %c0_i32_0 = arith.constant 0 : i32
    %c0_i32_1 = arith.constant 0 : i32
    return %c0_i32, %c0_i32_0 : i32, i32
  }
  func.func @transform_9(%arg0: i32) -> (i32, i32) {
    %c0_i32 = arith.constant 0 : i32
    %c0_i32_0 = arith.constant 0 : i32
    return %c0_i32, %arg0 : i32, i32
  }
}

</mosaic_0001>

<llo_original>
// kernel: tpu_custom_call.1
$region0: #{tpu_custom_call.1}
  #allocation0 [shape = 'u32[]', space=smem, size = 0x4, offset = 0x4, fixed_abs, tag = 'smem constant byte address 0x4 - core index']
  #allocation1 [shape = 'u32[72,128]{1,0:T(1,128)}', space=vmem, size = 0x9000, scoped, tag = 'internal scratch']
  #allocation2 [shape = 'f32[1,1]{1,0:T(1,128)S(1)}', space=vmem, size = 0x200, scoped, tag = 'scoped memory for tpu_custom_call.1']
  %s0 = inlined_call_operand.vmem [shape: f32[1,128], index: 0, kind: input, shape index: {}]
  %s1 = inlined_call_operand.vmem [shape: f32[16,1], index: 1, kind: input, shape index: {}]
  %s2 = inlined_call_operand.vmem [shape: f32[16,1], index: 2, kind: input, shape index: {}]
  %s3 = inlined_call_operand.vmem [shape: f32[128,16], index: 3, kind: input, shape index: {}]
  %s4 = inlined_call_operand.vmem [shape: f32[128,1], index: 4, kind: input, shape index: {}]
  %s5 = inlined_call_operand.vmem [shape: f32[16,128], index: 5, kind: input, shape index: {}]
  %s6 = inlined_call_operand.vmem [shape: f32[16,1], index: 6, kind: input, shape index: {}]
  %s7 = inlined_call_operand.vmem [shape: f32[16,1], index: 7, kind: input, shape index: {}]
  %s8 = inlined_call_operand.<no memory space> [shape: f32[1,1], index: 8, kind: input, shape index: {}]
  %s9 = inlined_call_operand.hbm [shape: f32[1,128], index: 9, kind: output, shape index: {}]
  %s10 = sld [smem:[#allocation0]]
  $region46: #{tpu_custom_call.1} parent=0
    _
  %s12 = ssub.s32 1, %s10
  %s13 = scalar_select 0, %s12, %s10
  %v14 = vstv %s8
  %15 = vst [vmem:[#allocation2] sm:$0x1] %v14
  $region1: #{tpu_custom_call.1} parent=0
    #allocation3 [shape = 'u8[512]{0}', space=vmem, size = 0x400, scoped, tag = 'output window, operand 0, single buffered']
    #allocation4 [shape = 's32[1]{0}', space=sflag, size = 0x4, scoped, tag = 'scoped memory for tpu_custom_call.1']
    %16 = vsyncpa [#allocation4], 0
    // Predicated region
    $region2: #{tpu_custom_call.1} parent=1 // pred_check
      _
    $region3: #{tpu_custom_call.1} parent=1 // pred_check_branch
      %18 = sbr.rel (0) target = $region5
    $region4: #{tpu_custom_call.1} parent=1 // pred_region
      _
    $region5: #{tpu_custom_call.1} parent=1 // pred_fallthru
      _
    // Predicated region
    $region6: #{tpu_custom_call.1} parent=1 // pred_check
      _
    $region7: #{tpu_custom_call.1} parent=1 // pred_check_branch
      %20 = sbr.rel (0) target = $region9
    $region8: #{tpu_custom_call.1} parent=1 // pred_region
      _
    $region9: #{tpu_custom_call.1} parent=1 // pred_fallthru
      _
    // Predicated region
    $region10: #{tpu_custom_call.1} parent=1 // pred_check
      _
    $region11: #{tpu_custom_call.1} parent=1 // pred_check_branch
      %22 = sbr.rel (0) target = $region13
    $region12: #{tpu_custom_call.1} parent=1 // pred_region
      _
    $region13: #{tpu_custom_call.1} parent=1 // pred_fallthru
      _
    // Predicated region
    $region14: #{tpu_custom_call.1} parent=1 // pred_check
      _
    $region15: #{tpu_custom_call.1} parent=1 // pred_check_branch
      %24 = sbr.rel (0) target = $region17
    $region16: #{tpu_custom_call.1} parent=1 // pred_region
      _
    $region17: #{tpu_custom_call.1} parent=1 // pred_fallthru
      _
    // Predicated region
    $region18: #{tpu_custom_call.1} parent=1 // pred_check
      _
    $region19: #{tpu_custom_call.1} parent=1 // pred_check_branch
      %26 = sbr.rel (0) target = $region21
    $region20: #{tpu_custom_call.1} parent=1 // pred_region
      _
    $region21: #{tpu_custom_call.1} parent=1 // pred_fallthru
      _
    // Predicated region
    $region22: #{tpu_custom_call.1} parent=1 // pred_check
      _
    $region23: #{tpu_custom_call.1} parent=1 // pred_check_branch
      %28 = sbr.rel (0) target = $region25
    $region24: #{tpu_custom_call.1} parent=1 // pred_region
      _
    $region25: #{tpu_custom_call.1} parent=1 // pred_fallthru
      _
    // Predicated region
    $region26: #{tpu_custom_call.1} parent=1 // pred_check
      _
    $region27: #{tpu_custom_call.1} parent=1 // pred_check_branch
      %30 = sbr.rel (0) target = $region29
    $region28: #{tpu_custom_call.1} parent=1 // pred_region
      _
    $region29: #{tpu_custom_call.1} parent=1 // pred_fallthru
      _
    // Predicated region
    $region30: #{tpu_custom_call.1} parent=1 // pred_check
      _
    $region31: #{tpu_custom_call.1} parent=1 // pred_check_branch
      %32 = sbr.rel (0) target = $region33
    $region32: #{tpu_custom_call.1} parent=1 // pred_region
      _
    $region33: #{tpu_custom_call.1} parent=1 // pred_fallthru
      _
    // Predicated region
    $region34: #{tpu_custom_call.1} parent=1 // pred_check
      _
    $region35: #{tpu_custom_call.1} parent=1 // pred_check_branch
      %34 = sbr.rel (0) target = $region37
    $region36: #{tpu_custom_call.1} parent=1 // pred_region
      _
    $region37: #{tpu_custom_call.1} parent=1 // pred_fallthru
      _
    %v35 = vld [vmem:[%s0] sm:$0x1]
    %v36 = vld [vmem:[%s1] sm:$0xff]
    %v37 = vld [vmem:[%s1 + $0x8] sm:$0xff]
    %39 = vset.pattern.permute.xlu0 0
    %40 = vperm.xlu0 %39, %v36
    %v41 = vpop.permute.xlu0 %40
    %44 = vset.pattern.permute.xlu0 0
    %45 = vperm.xlu0 %44, %v37
    %v46 = vpop.permute.xlu0 %45
    %v49 = vperm.slane %v35, 0
    %v51 = vmul.f32 %v41, %v49
    %v52 = vmul.f32 %v46, %v49
    %v53 = vld [vmem:[%s2] sm:$0xff]
    %v54 = vld [vmem:[%s2 + $0x8] sm:$0xff]
    %56 = vset.pattern.permute.xlu0 0
    %57 = vperm.xlu0 %56, %v53
    %v58 = vpop.permute.xlu0 %57
    %61 = vset.pattern.permute.xlu0 0
    %62 = vperm.xlu0 %61, %v54
    %v63 = vpop.permute.xlu0 %62
    %v65 = vadd.f32 %v51, %v58
    %v66 = vadd.f32 %v52, %v63
    %v67 = vmax.f32 %v65, 0.0
    %v68 = vmax.f32 %v66, 0.0
    %v69 = vld [vmem:[%s3] sm:$0xff]
    %v70 = vld [vmem:[%s3 + $0x8] sm:$0xff]
    %v71 = vld [vmem:[%s3 + $0x10] sm:$0xff]
    %v72 = vld [vmem:[%s3 + $0x18] sm:$0xff]
    %v73 = vld [vmem:[%s3 + $0x20] sm:$0xff]
    %v74 = vld [vmem:[%s3 + $0x28] sm:$0xff]
    %v75 = vld [vmem:[%s3 + $0x30] sm:$0xff]
    %v76 = vld [vmem:[%s3 + $0x38] sm:$0xff]
    %v77 = vld [vmem:[%s3 + $0x40] sm:$0xff]
    %v78 = vld [vmem:[%s3 + $0x48] sm:$0xff]
    %v79 = vld [vmem:[%s3 + $0x50] sm:$0xff]
    %v80 = vld [vmem:[%s3 + $0x58] sm:$0xff]
    %v81 = vld [vmem:[%s3 + $0x60] sm:$0xff]
    %v82 = vld [vmem:[%s3 + $0x68] sm:$0xff]
    %v83 = vld [vmem:[%s3 + $0x70] sm:$0xff]
    %v84 = vld [vmem:[%s3 + $0x78] sm:$0xff]
    %v85 = vld [vmem:[%s4] sm:$0xff]
    %v86 = vld [vmem:[%s4 + $0x8] sm:$0xff]
    %v87 = vld [vmem:[%s4 + $0x10] sm:$0xff]
    %v88 = vld [vmem:[%s4 + $0x18] sm:$0xff]
    %v89 = vld [vmem:[%s4 + $0x20] sm:$0xff]
    %v90 = vld [vmem:[%s4 + $0x28] sm:$0xff]
    %v91 = vld [vmem:[%s4 + $0x30] sm:$0xff]
    %v92 = vld [vmem:[%s4 + $0x38] sm:$0xff]
    %v93 = vld [vmem:[%s4 + $0x40] sm:$0xff]
    %v94 = vld [vmem:[%s4 + $0x48] sm:$0xff]
    %v95 = vld [vmem:[%s4 + $0x50] sm:$0xff]
    %v96 = vld [vmem:[%s4 + $0x58] sm:$0xff]
    %v97 = vld [vmem:[%s4 + $0x60] sm:$0xff]
    %v98 = vld [vmem:[%s4 + $0x68] sm:$0xff]
    %v99 = vld [vmem:[%s4 + $0x70] sm:$0xff]
    %v100 = vld [vmem:[%s4 + $0x78] sm:$0xff]
    %102 = vset.pattern.permute.xlu0 0
    %103 = vperm.xlu0 %102, %v85
    %v104 = vpop.permute.xlu0 %103
    %107 = vset.pattern.permute.xlu0 0
    %108 = vperm.xlu0 %107, %v86
    %v109 = vpop.permute.xlu0 %108
    %112 = vset.pattern.permute.xlu0 0
    %113 = vperm.xlu0 %112, %v87
    %v114 = vpop.permute.xlu0 %113
    %117 = vset.pattern.permute.xlu0 0
    %118 = vperm.xlu0 %117, %v88
    %v119 = vpop.permute.xlu0 %118
    %122 = vset.pattern.permute.xlu0 0
    %123 = vperm.xlu0 %122, %v89
    %v124 = vpop.permute.xlu0 %123
    %127 = vset.pattern.permute.xlu0 0
    %128 = vperm.xlu0 %127, %v90
    %v129 = vpop.permute.xlu0 %128
    %132 = vset.pattern.permute.xlu0 0
    %133 = vperm.xlu0 %132, %v91
    %v134 = vpop.permute.xlu0 %133
    %137 = vset.pattern.permute.xlu0 0
    %138 = vperm.xlu0 %137, %v92
    %v139 = vpop.permute.xlu0 %138
    %142 = vset.pattern.permute.xlu0 0
    %143 = vperm.xlu0 %142, %v93
    %v144 = vpop.permute.xlu0 %143
    %147 = vset.pattern.permute.xlu0 0
    %148 = vperm.xlu0 %147, %v94
    %v149 = vpop.permute.xlu0 %148
    %152 = vset.pattern.permute.xlu0 0
    %153 = vperm.xlu0 %152, %v95
    %v154 = vpop.permute.xlu0 %153
    %157 = vset.pattern.permute.xlu0 0
    %158 = vperm.xlu0 %157, %v96
    %v159 = vpop.permute.xlu0 %158
    %162 = vset.pattern.permute.xlu0 0
    %163 = vperm.xlu0 %162, %v97
    %v164 = vpop.permute.xlu0 %163
    %167 = vset.pattern.permute.xlu0 0
    %168 = vperm.xlu0 %167, %v98
    %v169 = vpop.permute.xlu0 %168
    %172 = vset.pattern.permute.xlu0 0
    %173 = vperm.xlu0 %172, %v99
    %v174 = vpop.permute.xlu0 %173
    %177 = vset.pattern.permute.xlu0 0
    %178 = vperm.xlu0 %177, %v100
    %v179 = vpop.permute.xlu0 %178
    %vm181 = vcmask 130048
    %v183 = vsel %vm181, %v69, 0
    %v186 = vsel %vm181, %v70, 0
    %v189 = vsel %vm181, %v71, 0
    %v192 = vsel %vm181, %v72, 0
    %v195 = vsel %vm181, %v73, 0
    %v198 = vsel %vm181, %v74, 0
    %v201 = vsel %vm181, %v75, 0
    %v204 = vsel %vm181, %v76, 0
    %v207 = vsel %vm181, %v77, 0
    %v210 = vsel %vm181, %v78, 0
    %v213 = vsel %vm181, %v79, 0
    %v216 = vsel %vm181, %v80, 0
    %v219 = vsel %vm181, %v81, 0
    %v222 = vsel %vm181, %v82, 0
    %v225 = vsel %vm181, %v83, 0
    %v228 = vsel %vm181, %v84, 0
    %230 = vmatpush.msra.mxu0 0.0
    %231 = vmatpush.msra.mxu0 0.0
    %232 = vmatpush.msra.mxu0 0.0
    %233 = vmatpush.msra.mxu0 0.0
    %234 = vmatpush.msra.mxu0 0.0
    %235 = vmatpush.msra.mxu0 0.0
    %236 = vmatpush.msra.mxu0 0.0
    %237 = vmatpush.msra.mxu0 0.0
    %238 = vmatpush.msra.mxu0 0.0
    %239 = vmatpush.msra.mxu0 0.0
    %240 = vmatpush.msra.mxu0 0.0
    %241 = vmatpush.msra.mxu0 0.0
    %242 = vmatpush.msra.mxu0 0.0
    %243 = vmatpush.msra.mxu0 0.0
    %244 = vmatpush.msra.mxu0 %v68
    %245 = vmatpush.msra.mxu0 %v67
    %246 = vmatmul.f32.gmra.mxu0 %v183
    %v247 = vpop.f32.mrf.mxu0
    %v248 = vadd.f32 %v104, %v247
    %249 = vmatmul.f32.gmra.mxu0 %v186
    %v250 = vpop.f32.mrf.mxu0
    %v251 = vadd.f32 %v109, %v250
    %252 = vmatmul.f32.gmra.mxu0 %v189
    %v253 = vpop.f32.mrf.mxu0
    %v254 = vadd.f32 %v114, %v253
    %255 = vmatmul.f32.gmra.mxu0 %v192
    %v256 = vpop.f32.mrf.mxu0
    %v257 = vadd.f32 %v119, %v256
    %258 = vmatmul.f32.gmra.mxu0 %v195
    %v259 = vpop.f32.mrf.mxu0
    %v260 = vadd.f32 %v124, %v259
    %261 = vmatmul.f32.gmra.mxu0 %v198
    %v262 = vpop.f32.mrf.mxu0
    %v263 = vadd.f32 %v129, %v262
    %264 = vmatmul.f32.gmra.mxu0 %v201
    %v265 = vpop.f32.mrf.mxu0
    %v266 = vadd.f32 %v134, %v265
    %267 = vmatmul.f32.gmra.mxu0 %v204
    %v268 = vpop.f32.mrf.mxu0
    %v269 = vadd.f32 %v139, %v268
    %270 = vmatmul.f32.gmra.mxu0 %v207
    %v271 = vpop.f32.mrf.mxu0
    %v272 = vadd.f32 %v144, %v271
    %273 = vmatmul.f32.gmra.mxu0 %v210
    %v274 = vpop.f32.mrf.mxu0
    %v275 = vadd.f32 %v149, %v274
    %276 = vmatmul.f32.gmra.mxu0 %v213
    %v277 = vpop.f32.mrf.mxu0
    %v278 = vadd.f32 %v154, %v277
    %279 = vmatmul.f32.gmra.mxu0 %v216
    %v280 = vpop.f32.mrf.mxu0
    %v281 = vadd.f32 %v159, %v280
    %282 = vmatmul.f32.gmra.mxu0 %v219
    %v283 = vpop.f32.mrf.mxu0
    %v284 = vadd.f32 %v164, %v283
    %285 = vmatmul.f32.gmra.mxu0 %v222
    %v286 = vpop.f32.mrf.mxu0
    %v287 = vadd.f32 %v169, %v286
    %288 = vmatmul.f32.gmra.mxu0 %v225
    %v289 = vpop.f32.mrf.mxu0
    %v290 = vadd.f32 %v174, %v289
    %291 = vmatmul.f32.gmra.mxu0 %v228
    %v292 = vpop.f32.mrf.mxu0
    %v293 = vadd.f32 %v179, %v292
    %294 = vdwg.mxu0
    %v295 = vmax.f32 %v248, 0.0
    %v296 = vmax.f32 %v251, 0.0
    %v297 = vmax.f32 %v254, 0.0
    %v298 = vmax.f32 %v257, 0.0
    %v299 = vmax.f32 %v260, 0.0
    %v300 = vmax.f32 %v263, 0.0
    %v301 = vmax.f32 %v266, 0.0
    %v302 = vmax.f32 %v269, 0.0
    %v303 = vmax.f32 %v272, 0.0
    %v304 = vmax.f32 %v275, 0.0
    %v305 = vmax.f32 %v278, 0.0
    %v306 = vmax.f32 %v281, 0.0
    %v307 = vmax.f32 %v284, 0.0
    %v308 = vmax.f32 %v287, 0.0
    %v309 = vmax.f32 %v290, 0.0
    %v310 = vmax.f32 %v293, 0.0
    %v311 = vld [vmem:[%s5] sm:$0xff]
    %v312 = vld [vmem:[%s5 + $0x8] sm:$0xff]
    %v313 = vld [vmem:[%s6] sm:$0xff]
    %v314 = vld [vmem:[%s6 + $0x8] sm:$0xff]
    %316 = vset.pattern.permute.xlu0 0
    %317 = vperm.xlu0 %316, %v313
    %v318 = vpop.permute.xlu0 %317
    %321 = vset.pattern.permute.xlu0 0
    %322 = vperm.xlu0 %321, %v314
    %v323 = vpop.permute.xlu0 %322
    %325 = vmatpush.msra.mxu0 %v310
    %326 = vmatpush.msra.mxu0 %v309
    %327 = vmatpush.msra.mxu0 %v308
    %328 = vmatpush.msra.mxu0 %v307
    %329 = vmatpush.msra.mxu0 %v306
    %330 = vmatpush.msra.mxu0 %v305
    %331 = vmatpush.msra.mxu0 %v304
    %332 = vmatpush.msra.mxu0 %v303
    %333 = vmatpush.msra.mxu0 %v302
    %334 = vmatpush.msra.mxu0 %v301
    %335 = vmatpush.msra.mxu0 %v300
    %336 = vmatpush.msra.mxu0 %v299
    %337 = vmatpush.msra.mxu0 %v298
    %338 = vmatpush.msra.mxu0 %v297
    %339 = vmatpush.msra.mxu0 %v296
    %340 = vmatpush.msra.mxu0 %v295
    %341 = vmatmul.f32.gmra.mxu0 %v311
    %v342 = vpop.f32.mrf.mxu0
    %v343 = vadd.f32 %v318, %v342
    %344 = vmatmul.f32.gmra.mxu0 %v312
    %v345 = vpop.f32.mrf.mxu0
    %v346 = vadd.f32 %v323, %v345
    %347 = vdwg.mxu0
    %v348 = vmax.f32 %v343, 0.0
    %v349 = vmax.f32 %v346, 0.0
    %v350 = vld [vmem:[%s7] sm:$0xff]
    %v351 = vld [vmem:[%s7 + $0x8] sm:$0xff]
    %353 = vset.pattern.permute.xlu0 0
    %354 = vperm.xlu0 %353, %v350
    %v355 = vpop.permute.xlu0 %354
    %358 = vset.pattern.permute.xlu0 0
    %359 = vperm.xlu0 %358, %v351
    %v360 = vpop.permute.xlu0 %359
    %v362 = vmul.f32 %v355, %v348
    %v363 = vmul.f32 %v360, %v349
    %v364 = vadd.f32 %v362, %v363
    %v365 = vrot.slane %v364, 4
    %v366 = vadd.f32 %v364, %v365
    %v367 = vrot.slane %v366, 2
    %v368 = vadd.f32 %v366, %v367
    %v369 = vrot.slane %v368, 1
    %v370 = vadd.f32 %v368, %v369
    %v371 = vld [vmem:[#allocation2] sm:$0x1]
    %373 = vset.pattern.permute.xlu0 0
    %374 = vperm.xlu0 %373, %v371
    %v375 = vpop.permute.xlu0 %374
    %v377 = vperm.slane %v375, 0
    %v378 = vadd.f32 %v370, %v377
    %379 = vst [vmem:[#allocation3] sm:$0x1] %v378
    // Predicated region
    $region38: #{tpu_custom_call.1} parent=1 // pred_check
      _
    $region39: #{tpu_custom_call.1} parent=1 // pred_check_branch
      %381 = sbr.rel (0) target = $region41
    $region40: #{tpu_custom_call.1} parent=1 // pred_region
      %383 = vsyncadd [#allocation4], 0
      %s385 = sshll.u32 [#allocation3], 4
      %s386 = int_to_ptr.vmem [resolvable:$true] %s385
      %s387 = sshll.u32 %s9, 4
      %s388 = int_to_ptr.hbm [resolvable:$true] %s387
      %390 = dma.vmem_to_hbm [thread:$0]  %s386, 16, %s388, [#allocation4]
    $region41: #{tpu_custom_call.1} parent=1 // pred_fallthru
      _
    // Predicated region
    $region42: #{tpu_custom_call.1} parent=1 // pred_check
      _
    $region43: #{tpu_custom_call.1} parent=1 // pred_check_branch
      %392 = sbr.rel (0) target = $region45
    $region44: #{tpu_custom_call.1} parent=1 // pred_region
      %394 = dma.done [#allocation4], 16
    $region45: #{tpu_custom_call.1} parent=1 // pred_fallthru
      _
    %395 = vsyncpa [#allocation4], 1

</llo_original>
